<compile_context>
chip_gen: v6e
topology: v6e:2x2x1
jax: 0.10.0
libtpu: 0.0.40
codegen_flags: <defaults>
</compile_context>

<pallas_src>
from functools import partial

import numpy as np
import jax
import jax.numpy as jnp
from jax.experimental import pallas as pl
from jax.experimental.pallas import tpu as pltpu


def pos_embed_kernel(ids_ref, table_ref, out_ref, *, vocab):
    # ids_ref:   (S, 1)     int32   token ids for this batch element
    # table_ref: (V+S, D)   float32 stacked [embedding table ; positional encodings]
    # out_ref:   (S, D)     float32
    ids = jnp.clip(ids_ref[...], 0, vocab - 1)                    # (S, 1)
    seq = ids.shape[0]
    k_total, _ = table_ref.shape                                  # V + S

    col = jax.lax.broadcasted_iota(jnp.int32, (seq, k_total), 1)  # category index
    pos = jax.lax.broadcasted_iota(jnp.int32, (seq, k_total), 0)  # position index

    # Two-hot selector: hit the token's embedding row (col == id) and its positional
    # row (col == vocab + pos).  The two hit columns are disjoint (id < vocab), so a
    # single MXU matmul yields embed[id] + pe[pos] directly.
    selector = ((col == ids) | (col == vocab + pos)).astype(jnp.float32)

    out_ref[...] = jnp.dot(selector, table_ref[...],
                           preferred_element_type=jnp.float32)


def position_embedding(ids, embed_table, pe):
    B, S = ids.shape
    V, D = embed_table.shape
    assert pe.shape == (S, D)
    K = V + S

    # Precomputed stacked table: rows [0, V) = embedding weights, rows [V, V+S) = PE.
    table_stacked = jnp.concatenate(
        [embed_table.astype(jnp.float32), pe.astype(jnp.float32)], axis=0)   # (K, D)

    # Present ids with a trailing size-1 lane dim so the kernel sees an (S, 1) column
    # (wrapper-side layout plumbing only — avoids an in-kernel relayout).
    ids3 = ids.astype(jnp.int32).reshape(B, S, 1)

    return pl.pallas_call(
        partial(pos_embed_kernel, vocab=V),
        out_shape=jax.ShapeDtypeStruct((B, S, D), jnp.float32),
        grid=(B,),
        in_specs=[
            pl.BlockSpec((None, S, 1), lambda b: (b, 0, 0)),   # ids: one batch row/step
            pl.BlockSpec((K, D), lambda b: (0, 0)),            # stacked table: resident
        ],
        out_specs=pl.BlockSpec((None, S, D), lambda b: (b, 0, 0)),
        compiler_params=pltpu.CompilerParams(
            dimension_semantics=("parallel",)),
    )(ids3, table_stacked)


def make_pe(seq_len=50, d_model=32):
    # Matches the PyTorch get_pe: d = 10000 ** (j / d_model); sin for even j, cos for odd j.
    pos = np.arange(seq_len, dtype=np.float64)[:, None]
    j = np.arange(d_model, dtype=np.float64)[None, :]
    angle = pos / (10000.0 ** (j / d_model))
    pe = np.where(j % 2 == 0, np.sin(angle), np.cos(angle)).astype(np.float32)
    return jnp.asarray(pe)


if __name__ == "__main__":
    B, S, V, D = 2, 50, 39, 32

    key = jax.random.PRNGKey(0)
    k_emb, k_ids = jax.random.split(key)

    # Embedding weight ~ N(0, 0.1) as in self.embed.weight.data.normal_(0, 0.1)
    embed_weight = 0.1 * jax.random.normal(k_emb, (V, D), dtype=jnp.float32)
    pe = make_pe(S, D)

    # Token ids in [0, V)
    x = jax.random.randint(k_ids, (B, S), 0, V, dtype=jnp.int32)

    out = position_embedding(x, embed_weight, pe)
    out = jax.block_until_ready(out)

    # Pure-JAX reference.
    ref = jnp.take(embed_weight, x, axis=0) + pe[None, :, :]
    np.testing.assert_allclose(np.asarray(out), np.asarray(ref), rtol=1e-5, atol=1e-5)

    print("KERNEL_OK")
</pallas_src>

<mosaic_0001>
module attributes {stable_mosaic.version = 11 : i64} {
  func.func @pos_embed_kernel(%arg0: i32, %arg1: memref<1x50x1xi32, #tpu.memory_space<vmem>>, %arg2: memref<89x32xf32, #tpu.memory_space<vmem>>, %arg3: memref<1x50x32xf32, #tpu.memory_space<vmem>>) attributes {dimension_semantics = [#tpu.dimension_semantics<parallel>], iteration_bounds = array<i64: 2>, scalar_prefetch = 0 : i64, scratch_operands = 0 : i64, tpu.core_type = #tpu.core_type<tc>, window_params = [{transform_indices = @transform_0, window_bounds = array<i64: 1, 50, 1>}, {pipeline_mode = #tpu.pipeline_mode<synchronous>, transform_indices = @transform_1, window_bounds = array<i64: 89, 32>}, {transform_indices = @transform_2, window_bounds = array<i64: 1, 50, 32>}]} {
    %c0 = arith.constant 0 : index
    %c0_0 = arith.constant 0 : index
    %c0_1 = arith.constant 0 : index
    %0 = vector.load %arg1[%c0, %c0_0, %c0_1] : memref<1x50x1xi32, #tpu.memory_space<vmem>>, vector<1x50x1xi32>
    %1 = vector.shape_cast %0 : vector<1x50x1xi32> to vector<50x1xi32>
    %c0_i32 = arith.constant 0 : i32
    %c38_i32 = arith.constant 38 : i32
    %2 = vector.broadcast %c0_i32 : i32 to vector<50x1xi32>
    %3 = arith.maxsi %2, %1 : vector<50x1xi32>
    %4 = vector.broadcast %c38_i32 : i32 to vector<50x1xi32>
    %5 = arith.minsi %4, %3 : vector<50x1xi32>
    %6 = tpu.iota {dimensions = array<i32: 1>} : vector<50x89xi32>
    %7 = tpu.iota {dimensions = array<i32: 0>} : vector<50x89xi32>
    %8 = vector.broadcast %5 : vector<50x1xi32> to vector<50x89xi32>
    %9 = arith.cmpi eq, %6, %8 : vector<50x89xi32>
    %c39_i32 = arith.constant 39 : i32
    %10 = vector.broadcast %c39_i32 : i32 to vector<50x89xi32>
    %11 = arith.addi %10, %7 : vector<50x89xi32>
    %12 = arith.cmpi eq, %6, %11 : vector<50x89xi32>
    %13 = arith.ori %9, %12 : vector<50x89xi1>
    %14 = arith.extui %13 : vector<50x89xi1> to vector<50x89xi32>
    %15 = arith.sitofp %14 : vector<50x89xi32> to vector<50x89xf32>
    %c0_2 = arith.constant 0 : index
    %c0_3 = arith.constant 0 : index
    %16 = vector.load %arg2[%c0_2, %c0_3] : memref<89x32xf32, #tpu.memory_space<vmem>>, vector<89x32xf32>
    %cst = arith.constant dense<0.000000e+00> : vector<50x32xf32>
    %17 = tpu.matmul %15, %16, %cst {dimension_numbers = #tpu.dot_dimension_numbers<[1], [0], [0], [1], [0, 0, 1, 1], [], []>} : vector<50x89xf32>, vector<89x32xf32>, vector<50x32xf32> -> vector<50x32xf32>
    %c0_4 = arith.constant 0 : index
    %c0_5 = arith.constant 0 : index
    %c0_6 = arith.constant 0 : index
    %18 = vector.load %arg3[%c0_4, %c0_5, %c0_6] : memref<1x50x32xf32, #tpu.memory_space<vmem>>, vector<1x50x32xf32>
    %19 = vector.shape_cast %18 : vector<1x50x32xf32> to vector<50x32xf32>
    %20 = vector.shape_cast %17 : vector<50x32xf32> to vector<1x50x32xf32>
    tpu.vector_store %arg3[%c0_4, %c0_5, %c0_6], %20 {strides = array<i32>} : memref<1x50x32xf32, #tpu.memory_space<vmem>>, vector<1x50x32xf32>,
    return
  }
  func.func @transform_0(%arg0: i32) -> (i32, i32, i32) {
    %c0_i32 = arith.constant 0 : i32
    %c0_i32_0 = arith.constant 0 : i32
    %c0_i32_1 = arith.constant 0 : i32
    return %arg0, %c0_i32, %c0_i32_0 : i32, i32, i32
  }
  func.func @transform_1(%arg0: i32) -> (i32, i32) {
    %c0_i32 = arith.constant 0 : i32
    %c0_i32_0 = arith.constant 0 : i32
    %c0_i32_1 = arith.constant 0 : i32
    return %c0_i32, %c0_i32_0 : i32, i32
  }
  func.func @transform_2(%arg0: i32) -> (i32, i32, i32) {
    %c0_i32 = arith.constant 0 : i32
    %c0_i32_0 = arith.constant 0 : i32
    %c0_i32_1 = arith.constant 0 : i32
    return %arg0, %c0_i32, %c0_i32_0 : i32, i32, i32
  }
}

</mosaic_0001>

<llo_original>
// kernel: tpu_custom_call.1
$region0: #{tpu_custom_call.1}
  #allocation0 [shape = 'u32[]', space=smem, size = 0x4, offset = 0x4, fixed_abs, tag = 'smem constant byte address 0x4 - core index']
  #allocation1 [shape = 'u32[144,128]{1,0:T(1,128)}', space=vmem, size = 0x12000, scoped, tag = 'internal scratch']
  %s0 = inlined_call_operand.vmem [shape: s32[2,50,1], index: 0, kind: input, shape index: {}]
  %s1 = inlined_call_operand.vmem [shape: f32[89,32], index: 1, kind: input, shape index: {}]
  %s2 = inlined_call_operand.vmem [shape: f32[2,50,32], index: 2, kind: output, shape index: {}]
  %s3 = sld [smem:[#allocation0]]
  $region41: #{tpu_custom_call.1} parent=0
    _
  %s5 = ssub.s32 1, %s3
  %s6 = scalar_select 0, %s5, %s3
  loop: start=0, step=1, limit=4
  $region2: #{tpu_custom_call.1} parent=0 // loop_pre_header
    _
  $region3: #{tpu_custom_call.1} parent=0 // loop_header
    %s8 = sphi 0, %s12
    %p9 = scmp.ge.s32.totalorder %s8, 4
    %s18 = sphi 0, %s20
    %s21 = sphi 0, %s18
    %s22 = sphi 0, %s21
    %s38 = sphi 0, %s22
    %s42 = sphi 0, %s42
    %s44 = sphi 0, %s42
    %s45 = sphi 0, %s44
    %s59 = sphi 0, %s45
    %s65 = sphi 0, %s67
    %s68 = sphi 0, %s65
    %s69 = sphi 0, %s68
    %s85 = sphi 0, %s69
  $region4: #{tpu_custom_call.1} parent=0 // loop_header_branch
    %11 = sbr.rel (%p9) target = $region8
  $region5: #{tpu_custom_call.1} parent=0 // loop_body
    %s13 = ssub.s32 %s8, 1
    %s14 = ssub.s32 %s8, 2
    %s15 = sadd.s32 %s8, 1
    %s16 = ssub.s32 %s8, %s15
    %p17 = scmp.eq.s32.totalorder %s16, 0
    %s19 = sadd.s32 %s18, 1
    %s20 = scalar_select %p17, %s18, %s19
    %p23 = pneg %p17
    %p24 = scmp.eq.s32.totalorder %s8, 1
    %p25 = por %p23, %p24
    %p26 = scmp.ne.s32.totalorder %s18, %s21
    %p27 = scmp.eq.s32.totalorder %s8, 0
    %p28 = por %p26, %p27
    %p29 = scmp.ne.s32.totalorder %s18, %s21
    %p30 = scmp.eq.s32.totalorder %s13, 1
    %p31 = por %p29, %p30
    %p32 = scmp.ne.s32.totalorder %s21, %s22
    %p33 = scmp.eq.s32.totalorder %s13, 0
    %p34 = por %p32, %p33
    %p35 = scmp.ne.s32.totalorder %s21, %s22
    %p36 = scmp.eq.s32.totalorder %s14, 1
    %p37 = por %p35, %p36
    %p39 = scmp.ne.s32.totalorder %s22, %s38
    %p40 = scmp.eq.s32.totalorder %s14, 0
    %p41 = por %p39, %p40
    %s43 = sadd.s32 %s42, 1
    %p46 = scmp.eq.s32.totalorder %s8, 1
    %p47 = scmp.ne.s32.totalorder %s42, %s44
    %p48 = scmp.eq.s32.totalorder %s8, 0
    %p49 = por %p47, %p48
    %p50 = scmp.ne.s32.totalorder %s42, %s44
    %p51 = scmp.eq.s32.totalorder %s13, 1
    %p52 = por %p50, %p51
    %p53 = scmp.ne.s32.totalorder %s44, %s45
    %p54 = scmp.eq.s32.totalorder %s13, 0
    %p55 = por %p53, %p54
    %p56 = scmp.ne.s32.totalorder %s44, %s45
    %p57 = scmp.eq.s32.totalorder %s14, 1
    %p58 = por %p56, %p57
    %p60 = scmp.ne.s32.totalorder %s45, %s59
    %p61 = scmp.eq.s32.totalorder %s14, 0
    %p62 = por %p60, %p61
    %s63 = ssub.s32 %s8, %s15
    %p64 = scmp.eq.s32.totalorder %s63, 0
    %s66 = sadd.s32 %s65, 1
    %s67 = scalar_select %p64, %s65, %s66
    %p70 = pneg %p64
    %p71 = scmp.eq.s32.totalorder %s8, 1
    %p72 = por %p70, %p71
    %p73 = scmp.ne.s32.totalorder %s65, %s68
    %p74 = scmp.eq.s32.totalorder %s8, 0
    %p75 = por %p73, %p74
    %p76 = scmp.ne.s32.totalorder %s65, %s68
    %p77 = scmp.eq.s32.totalorder %s13, 1
    %p78 = por %p76, %p77
    %p79 = scmp.ne.s32.totalorder %s68, %s69
    %p80 = scmp.eq.s32.totalorder %s13, 0
    %p81 = por %p79, %p80
    %p82 = scmp.ne.s32.totalorder %s68, %s69
    %p83 = scmp.eq.s32.totalorder %s14, 1
    %p84 = por %p82, %p83
    %p86 = scmp.ne.s32.totalorder %s69, %s85
    %p87 = scmp.eq.s32.totalorder %s14, 0
    %p88 = por %p86, %p87
    %p89 = scmp.le.s32.totalorder 1, %s8
    %p90 = scmp.lt.s32.totalorder %s8, 3
    %p91 = pnand %p89, %p90
    %p92 = pneg %p91
    // Predicated region
    $region9: #{tpu_custom_call.1} parent=5 // pred_check
      _
    $region10: #{tpu_custom_call.1} parent=5 // pred_check_branch
      %94 = sbr.rel (%p91) target = $region12
    $region11: #{tpu_custom_call.1} parent=5 // pred_region
      %s95 = ssub.s32 %s8, 1
      // Predicated region
      $region13: #{tpu_custom_call.1} parent=11 // pred_check
        %p96 = pneg %p55
      $region14: #{tpu_custom_call.1} parent=11 // pred_check_branch
        %98 = sbr.rel (%p96) target = $region16
      $region15: #{tpu_custom_call.1} parent=11 // pred_region
        _
      $region16: #{tpu_custom_call.1} parent=11 // pred_fallthru
        _
    $region12: #{tpu_custom_call.1} parent=5 // pred_fallthru
      _
    %p99 = scmp.lt.s32.totalorder %s8, 2
    // Predicated region
    $region17: #{tpu_custom_call.1} parent=5 // pred_check
      %p100 = pneg %p99
    $region18: #{tpu_custom_call.1} parent=5 // pred_check_branch
      %102 = sbr.rel (%p100) target = $region20
    $region19: #{tpu_custom_call.1} parent=5 // pred_region
      // Predicated region
      $region21: #{tpu_custom_call.1} parent=19 // pred_check
        %p103 = pneg %p28
      $region22: #{tpu_custom_call.1} parent=19 // pred_check_branch
        %105 = sbr.rel (%p103) target = $region24
      $region23: #{tpu_custom_call.1} parent=19 // pred_region
        %p106 = scmp.lt.s32.totalorder %s8, 1
        %s107 = scalar_select %p106, %s8, 1
        %s108 = smul.addr %s107, 7
        %s109 = smul.addr %s108, 8
        %s110 = scalar_lea.vmem %s0, %s109
      $region24: #{tpu_custom_call.1} parent=19 // pred_fallthru
        _
    $region20: #{tpu_custom_call.1} parent=5 // pred_fallthru
      _
    %p111 = scmp.le.s32.totalorder 1, %s8
    %p112 = scmp.lt.s32.totalorder %s8, 3
    %p113 = pnand %p111, %p112
    %p114 = pneg %p113
    // Predicated region
    $region25: #{tpu_custom_call.1} parent=5 // pred_check
      _
    $region26: #{tpu_custom_call.1} parent=5 // pred_check_branch
      %116 = sbr.rel (%p113) target = $region28
    $region27: #{tpu_custom_call.1} parent=5 // pred_region
      %s117 = ssub.s32 %s8, 1
      %p118 = scmp.lt.s32.totalorder %s13, 1
      %s119 = scalar_select %p118, %s13, 1
      %s120 = smul.addr %s119, 7
      %s121 = smul.addr %s120, 8
      %s122 = scalar_lea.vmem %s0, %s121
      %p123 = pneg %p34
      %p124 = pneg %p31
      %p125 = pneg %p55
      %p126 = pneg %p52
      %p127 = pneg %p81
      %p128 = pneg %p78
      %p129 = scmp.lt.s32.totalorder %s13, 1
      %s130 = scalar_select %p129, %s13, 1
      %s131 = smul.addr %s130, 7
      %s132 = smul.addr %s131, 8
      %s133 = scalar_lea.vmem %s2, %s132
      %p134 = scmp.lt.s32.totalorder %s13, 1
      %s135 = scalar_select %p134, %s13, 1
      %s136 = smul.addr %s135, 7
      %s137 = smul.addr %s136, 8
      %s138 = scalar_lea.vmem %s0, %s137
      %p139 = scmp.lt.s32.totalorder %s13, 1
      %s140 = scalar_select %p139, %s13, 1
      %s141 = smul.addr %s140, 7
      %s142 = smul.addr %s141, 8
      %s143 = scalar_lea.vmem %s2, %s142
      %v144 = vld [vmem:[%s138] sm:$0xff]
      %v145 = vld [vmem:[%s138 + $0x8] sm:$0xff]
      %v146 = vld [vmem:[%s138 + $0x10] sm:$0xff]
      %v147 = vld [vmem:[%s138 + $0x18] sm:$0xff]
      %v148 = vld [vmem:[%s138 + $0x20] sm:$0xff]
      %v149 = vld [vmem:[%s138 + $0x28] sm:$0xff]
      %v150 = vld [vmem:[%s138 + $0x30] sm:$0x3]
      %vm151 = vcmp.gt.s32.totalorder %v144, 0
      %v152 = vsel %vm151, %v144, 0
      %vm153 = vcmp.gt.s32.totalorder %v145, 0
      %v154 = vsel %vm153, %v145, 0
      %vm155 = vcmp.gt.s32.totalorder %v146, 0
      %v156 = vsel %vm155, %v146, 0
      %vm157 = vcmp.gt.s32.totalorder %v147, 0
      %v158 = vsel %vm157, %v147, 0
      %vm159 = vcmp.gt.s32.totalorder %v148, 0
      %v160 = vsel %vm159, %v148, 0
      %vm161 = vcmp.gt.s32.totalorder %v149, 0
      %v162 = vsel %vm161, %v149, 0
      %vm163 = vcmp.gt.s32.totalorder %v150, 0
      %v164 = vsel %vm163, %v150, 0
      %vm165 = vcmp.lt.s32.totalorder %v152, 38
      %v166 = vsel %vm165, %v152, 38
      %vm167 = vcmp.lt.s32.totalorder %v154, 38
      %v168 = vsel %vm167, %v154, 38
      %vm169 = vcmp.lt.s32.totalorder %v156, 38
      %v170 = vsel %vm169, %v156, 38
      %vm171 = vcmp.lt.s32.totalorder %v158, 38
      %v172 = vsel %vm171, %v158, 38
      %vm173 = vcmp.lt.s32.totalorder %v160, 38
      %v174 = vsel %vm173, %v160, 38
      %vm175 = vcmp.lt.s32.totalorder %v162, 38
      %v176 = vsel %vm175, %v162, 38
      %vm177 = vcmp.lt.s32.totalorder %v164, 38
      %v178 = vsel %vm177, %v164, 38
      %v179 = vlaneseq
      %v180 = vand.u32 %v179, 127
      %v181 = vlaneseq
      %v182 = vshrl.u32 %v181, 7
      %v183 = vadd.s32 %v182, 8
      %v184 = vadd.s32 %v182, 16
      %v185 = vadd.s32 %v182, 24
      %v186 = vadd.s32 %v182, 32
      %v187 = vadd.s32 %v182, 40
      %v188 = vadd.s32 %v182, 48
      %189 = vset.pattern.permute.xlu0 0
      %190 = vperm.xlu0 %189, %v166
      %v191 = vpop.permute.xlu0 %190
      %192 = vset.pattern.permute.xlu0 0
      %193 = vperm.xlu0 %192, %v168
      %v194 = vpop.permute.xlu0 %193
      %195 = vset.pattern.permute.xlu0 0
      %196 = vperm.xlu0 %195, %v170
      %v197 = vpop.permute.xlu0 %196
      %198 = vset.pattern.permute.xlu0 0
      %199 = vperm.xlu0 %198, %v172
      %v200 = vpop.permute.xlu0 %199
      %201 = vset.pattern.permute.xlu0 0
      %202 = vperm.xlu0 %201, %v174
      %v203 = vpop.permute.xlu0 %202
      %204 = vset.pattern.permute.xlu0 0
      %205 = vperm.xlu0 %204, %v176
      %v206 = vpop.permute.xlu0 %205
      %207 = vset.pattern.permute.xlu0 0
      %208 = vperm.xlu0 %207, %v178
      %v209 = vpop.permute.xlu0 %208
      %vm210 = vcmp.eq.s32.totalorder %v180, %v191
      %vm211 = vcmp.eq.s32.totalorder %v180, %v194
      %vm212 = vcmp.eq.s32.totalorder %v180, %v197
      %vm213 = vcmp.eq.s32.totalorder %v180, %v200
      %vm214 = vcmp.eq.s32.totalorder %v180, %v203
      %vm215 = vcmp.eq.s32.totalorder %v180, %v206
      %vm216 = vcmp.eq.s32.totalorder %v180, %v209
      %v217 = vadd.s32 %v182, 39
      %v218 = vadd.s32 %v183, 39
      %v219 = vadd.s32 %v184, 39
      %v220 = vadd.s32 %v185, 39
      %v221 = vadd.s32 %v186, 39
      %v222 = vadd.s32 %v187, 39
      %v223 = vadd.s32 %v188, 39
      %vm224 = vcmp.eq.s32.totalorder %v180, %v217
      %vm225 = vcmp.eq.s32.totalorder %v180, %v218
      %vm226 = vcmp.eq.s32.totalorder %v180, %v219
      %vm227 = vcmp.eq.s32.totalorder %v180, %v220
      %vm228 = vcmp.eq.s32.totalorder %v180, %v221
      %vm229 = vcmp.eq.s32.totalorder %v180, %v222
      %vm230 = vcmp.eq.s32.totalorder %v180, %v223
      %vm231 = vmor %vm210, %vm224
      %vm232 = vmor %vm211, %vm225
      %vm233 = vmor %vm212, %vm226
      %vm234 = vmor %vm213, %vm227
      %vm235 = vmor %vm214, %vm228
      %vm236 = vmor %vm215, %vm229
      %vm237 = vmor %vm216, %vm230
      %v238 = vsel %vm231, 1, 0
      %v239 = vsel %vm232, 1, 0
      %v240 = vsel %vm233, 1, 0
      %v241 = vsel %vm234, 1, 0
      %v242 = vsel %vm235, 1, 0
      %v243 = vsel %vm236, 1, 0
      %v244 = vsel %vm237, 1, 0
      %v245 = vcvt.s32.f32 %v238
      %v246 = vcvt.s32.f32 %v239
      %v247 = vcvt.s32.f32 %v240
      %v248 = vcvt.s32.f32 %v241
      %v249 = vcvt.s32.f32 %v242
      %v250 = vcvt.s32.f32 %v243
      %v251 = vcvt.s32.f32 %v244
      %v252 = vld [vmem:[%s1] sm:$0xff]
      %v253 = vld [vmem:[%s1 + $0x8] sm:$0xff]
      %v254 = vld [vmem:[%s1 + $0x10] sm:$0xff]
      %v255 = vld [vmem:[%s1 + $0x18] sm:$0xff]
      %v256 = vld [vmem:[%s1 + $0x20] sm:$0xff]
      %v257 = vld [vmem:[%s1 + $0x28] sm:$0xff]
      %v258 = vld [vmem:[%s1 + $0x30] sm:$0xff]
      %v259 = vld [vmem:[%s1 + $0x38] sm:$0xff]
      %v260 = vld [vmem:[%s1 + $0x40] sm:$0xff]
      %v261 = vld [vmem:[%s1 + $0x48] sm:$0xff]
      %v262 = vld [vmem:[%s1 + $0x50] sm:$0xff]
      %v263 = vld [vmem:[%s1 + $0x58] sm:$0x1]
      %vm264 = vcmask 728064
      %v266 = vsel %vm264, %v245, 0
      %v269 = vsel %vm264, %v246, 0
      %v272 = vsel %vm264, %v247, 0
      %v275 = vsel %vm264, %v248, 0
      %v278 = vsel %vm264, %v249, 0
      %v281 = vsel %vm264, %v250, 0
      %v284 = vsel %vm264, %v251, 0
      %vm286 = vcmask 1040384
      %v288 = vsel %vm286, %v263, 0
      %290 = vmatprep.subr.mxu0 0.0
      %291 = vmatpush1.msra.mxu0 0.0
      %292 = vmatprep.subr.mxu0 0.0
      %293 = vmatpush1.msra.mxu0 0.0
      %294 = vmatprep.subr.mxu0 0.0
      %295 = vmatpush1.msra.mxu0 0.0
      %296 = vmatprep.subr.mxu0 0.0
      %297 = vmatpush1.msra.mxu0 0.0
      %298 = vmatprep.subr.mxu0 0.0
      %299 = vmatpush1.msra.mxu0 %v288
      %300 = vmatprep.subr.mxu0 0.0
      %301 = vmatpush1.msra.mxu0 %v262
      %302 = vmatprep.subr.mxu0 0.0
      %303 = vmatpush1.msra.mxu0 %v261
      %304 = vmatprep.subr.mxu0 0.0
      %305 = vmatpush1.msra.mxu0 %v260
      %306 = vmatprep.subr.mxu0 0.0
      %307 = vmatpush1.msra.mxu0 %v259
      %308 = vmatprep.subr.mxu0 0.0
      %309 = vmatpush1.msra.mxu0 %v258
      %310 = vmatprep.subr.mxu0 0.0
      %311 = vmatpush1.msra.mxu0 %v257
      %312 = vmatprep.subr.mxu0 0.0
      %313 = vmatpush1.msra.mxu0 %v256
      %314 = vmatprep.subr.mxu0 0.0
      %315 = vmatpush1.msra.mxu0 %v255
      %316 = vmatprep.subr.mxu0 0.0
      %317 = vmatpush1.msra.mxu0 %v254
      %318 = vmatprep.subr.mxu0 0.0
      %319 = vmatpush1.msra.mxu0 %v253
      %320 = vmatprep.subr.mxu0 0.0
      %321 = vmatpush1.msra.mxu0 %v252
      %322 = vmatprep.subr.mxu0 0.0
      %323 = vmatpush2.msra.mxu0 0.0
      %324 = vmatprep.subr.mxu0 0.0
      %325 = vmatpush2.msra.mxu0 0.0
      %326 = vmatprep.subr.mxu0 0.0
      %327 = vmatpush2.msra.mxu0 0.0
      %328 = vmatprep.subr.mxu0 0.0
      %329 = vmatpush2.msra.mxu0 0.0
      %330 = vmatprep.subr.mxu0 0.0
      %331 = vmatpush2.msra.mxu0 0.0
      %332 = vmatprep.subr.mxu0 0.0
      %333 = vmatpush2.msra.mxu0 0.0
      %334 = vmatprep.subr.mxu0 0.0
      %335 = vmatpush2.msra.mxu0 0.0
      %336 = vmatprep.subr.mxu0 0.0
      %337 = vmatpush2.msra.mxu0 0.0
      %338 = vmatprep.subr.mxu0 0.0
      %339 = vmatpush2.msra.mxu0 0.0
      %340 = vmatprep.subr.mxu0 0.0
      %341 = vmatpush2.msra.mxu0 0.0
      %342 = vmatprep.subr.mxu0 0.0
      %343 = vmatpush2.msra.mxu0 0.0
      %344 = vmatprep.subr.mxu0 0.0
      %345 = vmatpush2.msra.mxu0 0.0
      %346 = vmatprep.subr.mxu0 0.0
      %347 = vmatpush2.msra.mxu0 0.0
      %348 = vmatprep.subr.mxu0 0.0
      %349 = vmatpush2.msra.mxu0 0.0
      %350 = vmatprep.subr.mxu0 0.0
      %351 = vmatpush2.msra.mxu0 0.0
      %352 = vmatprep.subr.mxu0 0.0
      %353 = vmatpush2.msra.mxu0 0.0
      %354 = vmatprep.mubr.f32.mxu0 0.0
      %355 = vmatmul.mubr.f32.gmra.mxu0 %v266
      %v356 = vpop.f32.mrf.mxu0
      %v357 = vadd.f32 0.0, %v356
      %v358 = vpop.f32.mrf.mxu0
      %359 = vmatprep.mubr.f32.mxu0 0.0
      %360 = vmatmul.mubr.f32.gmra.mxu0 %v269
      %v361 = vpop.f32.mrf.mxu0
      %v362 = vadd.f32 0.0, %v361
      %v363 = vpop.f32.mrf.mxu0
      %364 = vmatprep.mubr.f32.mxu0 0.0
      %365 = vmatmul.mubr.f32.gmra.mxu0 %v272
      %v366 = vpop.f32.mrf.mxu0
      %v367 = vadd.f32 0.0, %v366
      %v368 = vpop.f32.mrf.mxu0
      %369 = vmatprep.mubr.f32.mxu0 0.0
      %370 = vmatmul.mubr.f32.gmra.mxu0 %v275
      %v371 = vpop.f32.mrf.mxu0
      %v372 = vadd.f32 0.0, %v371
      %v373 = vpop.f32.mrf.mxu0
      %374 = vmatprep.mubr.f32.mxu0 0.0
      %375 = vmatmul.mubr.f32.gmra.mxu0 %v278
      %v376 = vpop.f32.mrf.mxu0
      %v377 = vadd.f32 0.0, %v376
      %v378 = vpop.f32.mrf.mxu0
      %379 = vmatprep.mubr.f32.mxu0 0.0
      %380 = vmatmul.mubr.f32.gmra.mxu0 %v281
      %v381 = vpop.f32.mrf.mxu0
      %v382 = vadd.f32 0.0, %v381
      %v383 = vpop.f32.mrf.mxu0
      %384 = vmatprep.mubr.f32.mxu0 0.0
      %385 = vmatmul.mubr.f32.gmra.mxu0 %v284
      %v386 = vpop.f32.mrf.mxu0
      %v387 = vadd.f32 0.0, %v386
      %v388 = vpop.f32.mrf.mxu0
      %389 = vdwg.mxu0
      %vm390 = vcmask 261120
      %391 = vst.msk [vmem:[%s143] sm:$0xff] %vm390, %v357
      %392 = vst.msk [vmem:[%s143 + $0x8] sm:$0xff] %vm390, %v362
      %393 = vst.msk [vmem:[%s143 + $0x10] sm:$0xff] %vm390, %v367
      %394 = vst.msk [vmem:[%s143 + $0x18] sm:$0xff] %vm390, %v372
      %395 = vst.msk [vmem:[%s143 + $0x20] sm:$0xff] %vm390, %v377
      %396 = vst.msk [vmem:[%s143 + $0x28] sm:$0xff] %vm390, %v382
      %vm397 = vcmask 254976
      %398 = vst.msk [vmem:[%s143 + $0x30] sm:$0x3] %vm397, %v387
      %p399 = scmp.lt.s32.totalorder %s13, 1
      %s400 = scalar_select %p399, %s13, 1
      %s401 = smul.addr %s400, 7
      %s402 = smul.addr %s401, 8
      %s403 = scalar_lea.vmem %s2, %s402
      // Predicated region
      $region29: #{tpu_custom_call.1} parent=27 // pred_check
        %p404 = pneg %p78
      $region30: #{tpu_custom_call.1} parent=27 // pred_check_branch
        %406 = sbr.rel (%p404) target = $region32
      $region31: #{tpu_custom_call.1} parent=27 // pred_region
        _
      $region32: #{tpu_custom_call.1} parent=27 // pred_fallthru
        _
    $region28: #{tpu_custom_call.1} parent=5 // pred_fallthru
      _
    %p407 = scmp.le.s32.totalorder 2, %s8
    // Predicated region
    $region33: #{tpu_custom_call.1} parent=5 // pred_check
      %p408 = pneg %p407
    $region34: #{tpu_custom_call.1} parent=5 // pred_check_branch
      %410 = sbr.rel (%p408) target = $region36
    $region35: #{tpu_custom_call.1} parent=5 // pred_region
      %s411 = ssub.s32 %s8, 2
      // Predicated region
      $region37: #{tpu_custom_call.1} parent=35 // pred_check
        %p412 = pneg %p84
      $region38: #{tpu_custom_call.1} parent=35 // pred_check_branch
        %414 = sbr.rel (%p412) target = $region40
      $region39: #{tpu_custom_call.1} parent=35 // pred_region
        %p415 = scmp.lt.s32.totalorder %s14, 1
        %s416 = scalar_select %p415, %s14, 1
        %s417 = smul.addr %s416, 7
        %s418 = smul.addr %s417, 8
        %s419 = scalar_lea.vmem %s2, %s418
      $region40: #{tpu_custom_call.1} parent=35 // pred_fallthru
        _
    $region36: #{tpu_custom_call.1} parent=5 // pred_fallthru
      _
  $region6: #{tpu_custom_call.1} parent=0 // loop_footer
    %s12 = sadd.s32 1, %s8
  $region7: #{tpu_custom_call.1} parent=0 // loop_footer_branch
    %7 = sbr.rel target = $region3
  $region8: #{tpu_custom_call.1} parent=0 // loop_exit
    _

</llo_original>
